<compile_context>
chip_gen: v5e
topology: v5e:2x2
jax: 0.10.0
libtpu: 0.0.40
codegen_flags: <defaults>
</compile_context>

<pallas_src>
import functools

import jax
import jax.numpy as jnp
from jax.experimental import pallas as pl
from jax.experimental.pallas import tpu as pltpu

BN_EPS = 1e-5


# ------------------------------- kernels -----------------------------------


def channel_att_reduce_kernel(x_ref, sums_ref):
    """Accumulate per-row (= per (n, c)) spatial sums over the tiled H*W axis.

    x_ref:    (ROW_TILE, TILE_HW)  native dtype
    sums_ref: (ROW_TILE, 1)        f32, resident across the reduction axis
    """
    @pl.when(pl.program_id(1) == 0)
    def _():
        sums_ref[...] = jnp.zeros_like(sums_ref)

    tile = x_ref[...].astype(jnp.float32)           # f32 accumulation (safe on v5e too)
    sums_ref[...] += jnp.sum(tile, axis=-1, keepdims=True)


def channel_att_epilogue_kernel(sums_ref, wt_ref, b_ref, att_ref, *,
                                inv_hw, conv_in_channels):
    """Finalize: mean -> (expand) -> BN-folded 1x1 conv -> ReLU. Runs once.

    sums_ref: (N, C_in)            f32 per-channel spatial sums
    wt_ref:   (C_conv_in, C_out)   f32 BN-folded conv weight, pre-transposed
    b_ref:    (1, C_out)           f32 BN-folded bias
    att_ref:  (N, C_out)           f32
    """
    m = sums_ref[...] * jnp.float32(inv_hw)          # spatial mean
    if m.shape[1] != conv_in_channels:               # in_channels == 1 expand path
        m = jnp.broadcast_to(m, (m.shape[0], conv_in_channels))
    y = jnp.dot(m, wt_ref[...], preferred_element_type=jnp.float32)
    y = y + b_ref[...]
    att_ref[...] = jnp.maximum(y, 0.0)


# ------------------------------- wrapper ------------------------------------


def _largest_divisor(total, unit, cap):
    """Largest d with d % unit == 0, total % d == 0 and d <= cap (None if none)."""
    if total % unit != 0 or cap < unit:
        return None
    best = None
    d = unit
    stop = min(total, cap)
    while d <= stop:
        if total % d == 0:
            best = d
        d += unit
    return best


def channel_att_forward(x, params, in_channels, out_channels,
                        max_block_bytes=4 << 20):
    """x: (N, C_in, H, W) NCHW. Returns (x, atten) with atten (N, C_out, 1, 1)."""
    n, c, h, w = x.shape
    assert c == in_channels
    # conv_1x1 always maps out_channels -> out_channels (see ChannelAtt.__init__),
    # so the non-expand path implicitly requires in_channels == out_channels.
    assert in_channels == out_channels or in_channels == 1

    hw = h * w
    rows = n * c
    x2 = x.reshape(rows, hw)                         # stream in native dtype

    # --- fold BatchNorm2d (eval mode, running stats) into the 1x1 conv ------
    scale = params["bn_gamma"] * jax.lax.rsqrt(params["bn_rvar"] + BN_EPS)      # (C_out,)
    w_eff_t = (params["conv_w"] * scale[:, None]).T.astype(jnp.float32)         # (C_conv_in, C_out)
    b_eff = ((params["conv_b"] - params["bn_rmean"]) * scale
             + params["bn_beta"]).reshape(1, out_channels).astype(jnp.float32)

    # --- tile selection: <= max_block_bytes per input block, (8,128) aligned -
    itemsize = jnp.dtype(x2.dtype).itemsize
    row_tile = _largest_divisor(rows, 8, 256) or rows
    hw_cap = max(max_block_bytes // (row_tile * itemsize), 1)
    tile_hw = _largest_divisor(hw, 128, min(hw, hw_cap))
    if tile_hw is None:
        tile_hw = 128 if hw % 128 == 0 else hw

    grid = (rows // row_tile, hw // tile_hw)

    # --- kernel 1: HBM-bandwidth-bound spatial-sum reduction -----------------
    sums = pl.pallas_call(
        channel_att_reduce_kernel,
        out_shape=jax.ShapeDtypeStruct((rows, 1), jnp.float32),
        grid=grid,
        in_specs=[pl.BlockSpec((row_tile, tile_hw), lambda r, k: (r, k))],
        out_specs=pl.BlockSpec((row_tile, 1), lambda r, k: (r, 0)),
        compiler_params=pltpu.CompilerParams(
            dimension_semantics=("parallel", "arbitrary")),
    )(x2)

    sums2d = sums.reshape(n, c)                      # (N, C_in) per-channel sums

    # --- kernel 2: tiny one-shot epilogue (mean, expand, conv+BN+ReLU) -------
    full = lambda shape: pl.BlockSpec(shape, lambda: (0,) * len(shape))
    atten = pl.pallas_call(
        functools.partial(channel_att_epilogue_kernel,
                          inv_hw=1.0 / hw, conv_in_channels=out_channels),
        out_shape=jax.ShapeDtypeStruct((n, out_channels), jnp.float32),
        grid=(),
        in_specs=[full(sums2d.shape), full(w_eff_t.shape), full(b_eff.shape)],
        out_specs=full((n, out_channels)),
    )(sums2d, w_eff_t, b_eff)

    return x, atten.reshape(n, out_channels, 1, 1)


# ------------------------------- test helpers -------------------------------


def make_params(key, out_channels):
    # conv_1x1 = ConvModule(out_channels, out_channels, 1) -> weight (C_out, C_out)
    k = jax.random.split(key, 6)
    return {
        "conv_w": jax.random.normal(k[0], (out_channels, out_channels), jnp.float32) * 0.1,
        "conv_b": jax.random.normal(k[1], (out_channels,), jnp.float32) * 0.1,
        "bn_gamma": 1.0 + 0.1 * jax.random.normal(k[2], (out_channels,), jnp.float32),
        "bn_beta": 0.1 * jax.random.normal(k[3], (out_channels,), jnp.float32),
        "bn_rmean": 0.1 * jax.random.normal(k[4], (out_channels,), jnp.float32),
        "bn_rvar": 0.5 + jnp.abs(jax.random.normal(k[5], (out_channels,), jnp.float32)),
    }


def reference_forward(x, params, in_channels, out_channels):
    """Pure-JAX reference matching the PyTorch module (eval-mode BN)."""
    atten = jnp.mean(x.astype(jnp.float32), axis=(2, 3), keepdims=True)   # (N, C_in, 1, 1)
    if in_channels == 1:
        atten = jnp.broadcast_to(atten, (x.shape[0], out_channels, 1, 1))
    a = atten[:, :, 0, 0]                                                  # (N, C_conv_in)
    y = a @ params["conv_w"].T + params["conv_b"]
    y = (y - params["bn_rmean"]) / jnp.sqrt(params["bn_rvar"] + BN_EPS)
    y = y * params["bn_gamma"] + params["bn_beta"]
    y = jnp.maximum(y, 0.0)
    return x, y.reshape(x.shape[0], out_channels, 1, 1)


if __name__ == "__main__":
    key = jax.random.PRNGKey(0)
    kx1, kx2, kp1, kp2 = jax.random.split(key, 4)

    # Case 1: standard path (in_channels == out_channels), default tiling.
    N, C, H, W = 2, 4, 16, 16
    x = jax.random.normal(kx1, (N, C, H, W), jnp.float32)
    params = make_params(kp1, C)

    x_out, atten = channel_att_forward(x, params, C, C)
    jax.block_until_ready(atten)
    x_ref, atten_ref = reference_forward(x, params, C, C)
    assert x_out.shape == (N, C, H, W)
    assert atten.shape == (N, C, 1, 1)
    assert jnp.allclose(x_out, x_ref)
    assert jnp.allclose(atten, atten_ref, atol=2e-5, rtol=2e-5)

    # Case 2: same inputs but a tiny block budget to force a multi-step
    # (accumulated) reduction over the H*W grid axis.
    _, atten_small = channel_att_forward(x, params, C, C,
                                         max_block_bytes=8 * 128 * 4)
    jax.block_until_ready(atten_small)
    assert jnp.allclose(atten_small, atten_ref, atol=2e-5, rtol=2e-5)

    # Case 3: in_channels == 1 expand path.
    C_OUT = 4
    x1 = jax.random.normal(kx2, (N, 1, H, W), jnp.float32)
    params1 = make_params(kp2, C_OUT)
    _, atten1 = channel_att_forward(x1, params1, 1, C_OUT)
    jax.block_until_ready(atten1)
    _, atten1_ref = reference_forward(x1, params1, 1, C_OUT)
    assert atten1.shape == (N, C_OUT, 1, 1)
    assert jnp.allclose(atten1, atten1_ref, atol=2e-5, rtol=2e-5)

    print("KERNEL_OK")
</pallas_src>

<mosaic_0001>
module attributes {stable_mosaic.version = 11 : i64} {
  func.func @channel_att_reduce_kernel(%arg0: i32, %arg1: i32, %arg2: memref<8x256xf32, #tpu.memory_space<vmem>>, %arg3: memref<8x1xf32, #tpu.memory_space<vmem>>) attributes {dimension_semantics = [#tpu.dimension_semantics<parallel>, #tpu.dimension_semantics<arbitrary>], iteration_bounds = array<i64: 1, 1>, scalar_prefetch = 0 : i64, scratch_operands = 0 : i64, tpu.core_type = #tpu.core_type<tc>, window_params = [{transform_indices = @transform_0, window_bounds = array<i64: 8, 256>}, {transform_indices = @transform_1, window_bounds = array<i64: 8, 1>}]} {
    %c0_i32 = arith.constant 0 : i32
    %0 = arith.cmpi eq, %arg1, %c0_i32 : i32
    %1 = arith.extui %0 : i1 to i32
    %c0_i32_0 = arith.constant 0 : i32
    %2 = arith.cmpi ne, %1, %c0_i32_0 : i32
    scf.if %2 {
      %cst_6 = arith.constant 0.000000e+00 : f32
      %9 = vector.broadcast %cst_6 : f32 to vector<8x1xf32>
      %c0_7 = arith.constant 0 : index
      %c0_8 = arith.constant 0 : index
      %10 = vector.load %arg3[%c0_7, %c0_8] : memref<8x1xf32, #tpu.memory_space<vmem>>, vector<8x1xf32>
      tpu.vector_store %arg3[%c0_7, %c0_8], %9 {strides = array<i32>} : memref<8x1xf32, #tpu.memory_space<vmem>>, vector<8x1xf32>,
    } else {
    }
    %c0 = arith.constant 0 : index
    %c0_1 = arith.constant 0 : index
    %3 = vector.load %arg2[%c0, %c0_1] : memref<8x256xf32, #tpu.memory_space<vmem>>, vector<8x256xf32>
    %c0_2 = arith.constant 0 : index
    %c0_3 = arith.constant 0 : index
    %4 = vector.load %arg3[%c0_2, %c0_3] : memref<8x1xf32, #tpu.memory_space<vmem>>, vector<8x1xf32>
    %cst = arith.constant dense<0.000000e+00> : vector<8xf32>
    %5 = vector.multi_reduction <add>, %3, %cst [1] : vector<8x256xf32> to vector<8xf32>
    %6 = vector.shape_cast %5 : vector<8xf32> to vector<8x1xf32>
    %7 = arith.addf %4, %6 : vector<8x1xf32>
    %c0_4 = arith.constant 0 : index
    %c0_5 = arith.constant 0 : index
    %8 = vector.load %arg3[%c0_4, %c0_5] : memref<8x1xf32, #tpu.memory_space<vmem>>, vector<8x1xf32>
    tpu.vector_store %arg3[%c0_4, %c0_5], %7 {strides = array<i32>} : memref<8x1xf32, #tpu.memory_space<vmem>>, vector<8x1xf32>,
    return
  }
  func.func @transform_0(%arg0: i32, %arg1: i32) -> (i32, i32) {
    %c0_i32 = arith.constant 0 : i32
    return %arg0, %arg1 : i32, i32
  }
  func.func @transform_1(%arg0: i32, %arg1: i32) -> (i32, i32) {
    %c0_i32 = arith.constant 0 : i32
    %c0_i32_0 = arith.constant 0 : i32
    return %arg0, %c0_i32 : i32, i32
  }
}

</mosaic_0001>

<llo_original>
// kernel: tpu_custom_call.1
$region0: #{tpu_custom_call.1}
  #allocation0 [shape = 'u32[]', space=smem, size = 0x4, offset = 0x4, fixed_abs, tag = 'smem constant byte address 0x4 - core index']
  #allocation1 [shape = 'u32[72,128]{1,0:T(1,128)}', space=vmem, size = 0x9000, scoped, tag = 'internal scratch']
  %s0 = inlined_call_operand.hbm [shape: f32[8,256], index: 0, kind: input, shape index: {}]
  %s1 = inlined_call_operand.vmem [shape: f32[8,1], index: 1, kind: output, shape index: {}]
  %s2 = sld [smem:[#allocation0]]
  $region22: #{tpu_custom_call.1} parent=0
    _
  %s4 = ssub.s32 1, %s2
  %s5 = scalar_select 0, %s4, %s2
  $region1: #{tpu_custom_call.1} parent=0
    #allocation2 [shape = 'u8[8192]{0}', space=vmem, size = 0x2000, scoped, tag = 'input window, operand 0, single buffered']
    #allocation3 [shape = 's32[1]{0}', space=sflag, size = 0x4, scoped, tag = 'scoped memory for tpu_custom_call.1']
    %6 = vsyncpa [#allocation3], 0
    // Predicated region
    $region2: #{tpu_custom_call.1} parent=1 // pred_check
      _
    $region3: #{tpu_custom_call.1} parent=1 // pred_check_branch
      %8 = sbr.rel (0) target = $region5
    $region4: #{tpu_custom_call.1} parent=1 // pred_region
      %10 = vsyncadd [#allocation3], 0
      %s12 = sshll.u32 %s0, 4
      %s13 = int_to_ptr.hbm [resolvable:$true] %s12
      %s14 = sshll.u32 [#allocation2], 4
      %s15 = int_to_ptr.vmem [resolvable:$true] %s14
      %17 = dma.hbm_to_vmem [thread:$0]  %s13, 256, %s15, [#allocation3]
    $region5: #{tpu_custom_call.1} parent=1 // pred_fallthru
      _
    // Predicated region
    $region6: #{tpu_custom_call.1} parent=1 // pred_check
      _
    $region7: #{tpu_custom_call.1} parent=1 // pred_check_branch
      %19 = sbr.rel (0) target = $region9
    $region8: #{tpu_custom_call.1} parent=1 // pred_region
      %21 = dma.done [#allocation3], 256
    $region9: #{tpu_custom_call.1} parent=1 // pred_fallthru
      _
    %p22 = scmp.eq.s32.totalorder 0, 0
    // Predicated region
    $region10: #{tpu_custom_call.1} parent=1 // pred_check
      %p23 = pneg %p22
    $region11: #{tpu_custom_call.1} parent=1 // pred_check_branch
      %25 = sbr.rel (%p23) target = $region13
    $region12: #{tpu_custom_call.1} parent=1 // pred_region
      %vm26 = vcmask 7168
      %27 = vst.msk [vmem:[%s1] sm:$0xff] %vm26, 0.0
    $region13: #{tpu_custom_call.1} parent=1 // pred_fallthru
      _
    %v28 = vld [vmem:[#allocation2] sm:$0xff]
    %v29 = vld [vmem:[#allocation2 + $0x8] sm:$0xff]
    %v30 = vld [vmem:[%s1] sm:$0xff]
    %v31 = vadd.f32 %v28, %v29
    %32 = vadd.xlane.f32.xlu0 %v31
    %v33 = vpop.xlane.xlu0 %32
    %v34 = vadd.f32 %v30, %v33
    %vm35 = vcmask 7168
    %36 = vst.msk [vmem:[%s1] sm:$0xff] %vm35, %v34
    // Predicated region
    $region14: #{tpu_custom_call.1} parent=1 // pred_check
      _
    $region15: #{tpu_custom_call.1} parent=1 // pred_check_branch
      %38 = sbr.rel (0) target = $region17
    $region16: #{tpu_custom_call.1} parent=1 // pred_region
      _
    $region17: #{tpu_custom_call.1} parent=1 // pred_fallthru
      _
    // Predicated region
    $region18: #{tpu_custom_call.1} parent=1 // pred_check
      _
    $region19: #{tpu_custom_call.1} parent=1 // pred_check_branch
      %40 = sbr.rel (0) target = $region21
    $region20: #{tpu_custom_call.1} parent=1 // pred_region
      _
    $region21: #{tpu_custom_call.1} parent=1 // pred_fallthru
      _
    %41 = vsyncpa [#allocation3], 1

</llo_original>
